<compile_context>
chip_gen: v7x
topology: tpu7x:2x2x1
jax: 0.10.0
libtpu: 0.0.40
codegen_flags: <defaults>
</compile_context>

<pallas_src>
import functools

import jax
import jax.numpy as jnp
from jax.experimental import pallas as pl
from jax.experimental.pallas import tpu as pltpu


HIDDEN = 128
NUM_CLASSES = 11
LANE = 128


def _round_up(x, m):
    return ((x + m - 1) // m) * m


def _mlp_head_kernel(x_ref, w1_ref, b1_ref, w2_ref, b2_ref, o_ref):
    """Fused fc1 -> ReLU -> fc2 on one (TILE_B, D) batch tile.

    x_ref : (TILE_B, D)       bf16 (or f32)
    w1_ref: (D, 128)          bf16 (or f32)
    b1_ref: (1, 128)          f32
    w2_ref: (128, 128)        bf16 (or f32), zero-padded past column 10
    b2_ref: (1, 128)          f32, zero-padded past column 10
    o_ref : (TILE_B, 128)     f32
    """
    x = x_ref[...]
    # fc1 (bf16 inputs, f32 accumulate) + bias + ReLU in f32.
    h = jnp.dot(x, w1_ref[...], preferred_element_type=jnp.float32)
    h = jnp.maximum(h + b1_ref[...], 0.0)
    # fc2 on lane-dense (128-wide) padded weights.
    h = h.astype(w2_ref.dtype)
    o = jnp.dot(h, w2_ref[...], preferred_element_type=jnp.float32) + b2_ref[...]
    o_ref[...] = o.astype(o_ref.dtype)


@functools.partial(jax.jit, static_argnames=("compute_dtype",))
def _head_pallas(x2d, w1, b1, w2, b2, compute_dtype=jnp.bfloat16):
    """x2d: (B, D) f32. Returns (B, NUM_CLASSES) f32 logits."""
    B, D = x2d.shape
    H = w1.shape[1]
    N = w2.shape[1]
    N_pad = _round_up(N, LANE)  # lane-dense fc2 output (11 -> 128)

    # Cast matmul operands to the compute dtype (bf16 by default) - halves the
    # HBM->VMEM traffic that bounds this kernel; accumulation stays f32.
    x_c = x2d.astype(compute_dtype)
    w1_c = w1.astype(compute_dtype)
    b1_f = b1.reshape(1, H).astype(jnp.float32)
    w2_p = jnp.zeros((H, N_pad), jnp.float32).at[:, :N].set(w2).astype(compute_dtype)
    b2_p = jnp.zeros((1, N_pad), jnp.float32).at[0, :N].set(b2)

    # Batch tiling: multiples of 16 sublanes (bf16 packing), capped at 256 rows
    # per MXU pass; pad the batch so every tile is full (no OOB blocks).
    tile_b = 256 if B >= 256 else _round_up(max(B, 1), 16)
    B_pad = _round_up(B, tile_b)
    if B_pad != B:
        x_c = jnp.pad(x_c, ((0, B_pad - B), (0, 0)))
    grid = (B_pad // tile_b,)

    itemsize = jnp.dtype(compute_dtype).itemsize
    cost = pl.CostEstimate(
        flops=2 * B_pad * (D * H + H * N_pad),
        transcendentals=0,
        bytes_accessed=(B_pad * D * itemsize            # x stream
                        + D * H * itemsize + H * 4      # w1, b1
                        + H * N_pad * itemsize + N_pad * 4  # w2, b2
                        + B_pad * N_pad * 4),           # output
    )

    out = pl.pallas_call(
        _mlp_head_kernel,
        out_shape=jax.ShapeDtypeStruct((B_pad, N_pad), jnp.float32),
        grid=grid,
        in_specs=[
            pl.BlockSpec((tile_b, D), lambda i: (i, 0)),     # x: streamed per tile
            pl.BlockSpec((D, H), lambda i: (0, 0)),          # w1: resident
            pl.BlockSpec((1, H), lambda i: (0, 0)),          # b1: resident
            pl.BlockSpec((H, N_pad), lambda i: (0, 0)),      # w2 (padded): resident
            pl.BlockSpec((1, N_pad), lambda i: (0, 0)),      # b2 (padded): resident
        ],
        out_specs=pl.BlockSpec((tile_b, N_pad), lambda i: (i, 0)),
        compiler_params=pltpu.CompilerParams(
            dimension_semantics=("parallel",),               # 2x on v7x (2 TCs)
        ),
        cost_estimate=cost,
    )(x_c, w1_c, b1_f, w2_p, b2_p)

    # Drop batch padding and the dead (zero-weight) output columns.
    return out[:B, :N]


def downstream_two_layer_classifier(x, params, encoder=lambda t: t,
                                    compute_dtype=jnp.bfloat16):
    """Mirrors DownStreamTwoLayerClassifier.forward.

    x: (B, 1, input_depth) f32 (pre-encoder input; encoder is identity here).
    params: w1 (D,128), b1 (128,), w2 (128,11), b2 (11,)  — (in, out) layout.
    Returns: (B, 11) f32 — same as PyTorch's x.squeeze(1) result.
    """
    x = encoder(x)                       # (B, 1, D)
    B, S, D = x.shape
    assert S == 1, "squeeze(1) in the reference implies a singleton middle dim"
    x2d = x.reshape(B * S, D)
    return _head_pallas(x2d, params["w1"], params["b1"], params["w2"],
                        params["b2"], compute_dtype=compute_dtype)


def init_params(key, input_depth=1024, hidden=HIDDEN, num_classes=NUM_CLASSES):
    """Deterministic init matching nn.Linear shapes (weights kept as (in, out))."""
    k1, k2, k3, k4 = jax.random.split(key, 4)
    s1 = 1.0 / jnp.sqrt(input_depth)
    s2 = 1.0 / jnp.sqrt(hidden)
    return {
        "w1": jax.random.uniform(k1, (input_depth, hidden), jnp.float32, -s1, s1),
        "b1": jax.random.uniform(k2, (hidden,), jnp.float32, -s1, s1),
        "w2": jax.random.uniform(k3, (hidden, num_classes), jnp.float32, -s2, s2),
        "b2": jax.random.uniform(k4, (num_classes,), jnp.float32, -s2, s2),
    }


if __name__ == "__main__":
    key = jax.random.PRNGKey(0)
    k_in, k_p = jax.random.split(key)

    B = 8
    INPUT_DEPTH = 1024  # module default

    # encoder output shape (B, 1, input_depth), consistent with squeeze(1)
    x = jax.random.normal(k_in, (B, 1, INPUT_DEPTH), dtype=jnp.float32)
    params = init_params(k_p, input_depth=INPUT_DEPTH)

    out = downstream_two_layer_classifier(x, params)
    out = jax.block_until_ready(out)
    assert out.shape == (B, NUM_CLASSES), out.shape

    # Reference 1: pure-JAX with the same bf16-in / f32-accumulate precision
    # (validates the kernel itself, tight tolerance).
    xb = x.reshape(B, INPUT_DEPTH).astype(jnp.bfloat16)
    w1b = params["w1"].astype(jnp.bfloat16)
    w2b = params["w2"].astype(jnp.bfloat16)
    h = jnp.maximum(
        jnp.dot(xb, w1b, preferred_element_type=jnp.float32) + params["b1"], 0.0)
    ref_bf16 = (jnp.dot(h.astype(jnp.bfloat16), w2b,
                        preferred_element_type=jnp.float32) + params["b2"])
    assert jnp.allclose(out, ref_bf16, atol=1e-4, rtol=1e-4), (
        float(jnp.max(jnp.abs(out - ref_bf16))))

    # Reference 2: full-f32 PyTorch-equivalent forward (loose tolerance — bf16
    # MXU inputs with f32 accumulation).
    ref_f32 = jnp.maximum(
        x.reshape(B, INPUT_DEPTH) @ params["w1"] + params["b1"], 0.0)
    ref_f32 = ref_f32 @ params["w2"] + params["b2"]
    assert jnp.allclose(out, ref_f32, atol=2e-2, rtol=2e-2), (
        float(jnp.max(jnp.abs(out - ref_f32))))

    print("KERNEL_OK")
</pallas_src>

<mosaic_0001>
module attributes {stable_mosaic.version = 11 : i64} {
  func.func @_mlp_head_kernel(%arg0: i32, %arg1: memref<16x1024xbf16, #tpu.memory_space<vmem>>, %arg2: memref<1024x128xbf16, #tpu.memory_space<vmem>>, %arg3: memref<1x128xf32, #tpu.memory_space<vmem>>, %arg4: memref<128x128xbf16, #tpu.memory_space<vmem>>, %arg5: memref<1x128xf32, #tpu.memory_space<vmem>>, %arg6: memref<16x128xf32, #tpu.memory_space<vmem>>) attributes {dimension_semantics = [#tpu.dimension_semantics<parallel>], iteration_bounds = array<i64: 1>, scalar_prefetch = 0 : i64, scratch_operands = 0 : i64, tpu.core_type = #tpu.core_type<tc>, window_params = [{transform_indices = @transform_0, window_bounds = array<i64: 16, 1024>}, {pipeline_mode = #tpu.pipeline_mode<synchronous>, transform_indices = @transform_1, window_bounds = array<i64: 1024, 128>}, {pipeline_mode = #tpu.pipeline_mode<synchronous>, transform_indices = @transform_2, window_bounds = array<i64: 1, 128>}, {pipeline_mode = #tpu.pipeline_mode<synchronous>, transform_indices = @transform_3, window_bounds = array<i64: 128, 128>}, {pipeline_mode = #tpu.pipeline_mode<synchronous>, transform_indices = @transform_4, window_bounds = array<i64: 1, 128>}, {transform_indices = @transform_5, window_bounds = array<i64: 16, 128>}]} {
    %c0 = arith.constant 0 : index
    %c0_0 = arith.constant 0 : index
    %0 = vector.load %arg1[%c0, %c0_0] : memref<16x1024xbf16, #tpu.memory_space<vmem>>, vector<16x1024xbf16>
    %c0_1 = arith.constant 0 : index
    %c0_2 = arith.constant 0 : index
    %1 = vector.load %arg2[%c0_1, %c0_2] : memref<1024x128xbf16, #tpu.memory_space<vmem>>, vector<1024x128xbf16>
    %cst = arith.constant dense<0.000000e+00> : vector<16x128xf32>
    %2 = tpu.matmul %0, %1, %cst {dimension_numbers = #tpu.dot_dimension_numbers<[1], [0], [0], [1], [0, 0, 1, 1], [], []>} : vector<16x1024xbf16>, vector<1024x128xbf16>, vector<16x128xf32> -> vector<16x128xf32>
    %c0_3 = arith.constant 0 : index
    %c0_4 = arith.constant 0 : index
    %3 = vector.load %arg3[%c0_3, %c0_4] : memref<1x128xf32, #tpu.memory_space<vmem>>, vector<1x128xf32>
    %4 = vector.broadcast %3 : vector<1x128xf32> to vector<16x128xf32>
    %5 = arith.addf %2, %4 : vector<16x128xf32>
    %cst_5 = arith.constant 0.000000e+00 : f32
    %6 = vector.broadcast %cst_5 : f32 to vector<16x128xf32>
    %7 = arith.maximumf %5, %6 : vector<16x128xf32>
    %8 = arith.truncf %7 : vector<16x128xf32> to vector<16x128xbf16>
    %c0_6 = arith.constant 0 : index
    %c0_7 = arith.constant 0 : index
    %9 = vector.load %arg4[%c0_6, %c0_7] : memref<128x128xbf16, #tpu.memory_space<vmem>>, vector<128x128xbf16>
    %cst_8 = arith.constant dense<0.000000e+00> : vector<16x128xf32>
    %10 = tpu.matmul %8, %9, %cst_8 {dimension_numbers = #tpu.dot_dimension_numbers<[1], [0], [0], [1], [0, 0, 1, 1], [], []>} : vector<16x128xbf16>, vector<128x128xbf16>, vector<16x128xf32> -> vector<16x128xf32>
    %c0_9 = arith.constant 0 : index
    %c0_10 = arith.constant 0 : index
    %11 = vector.load %arg5[%c0_9, %c0_10] : memref<1x128xf32, #tpu.memory_space<vmem>>, vector<1x128xf32>
    %12 = vector.broadcast %11 : vector<1x128xf32> to vector<16x128xf32>
    %13 = arith.addf %10, %12 : vector<16x128xf32>
    %c0_11 = arith.constant 0 : index
    %c0_12 = arith.constant 0 : index
    %14 = vector.load %arg6[%c0_11, %c0_12] : memref<16x128xf32, #tpu.memory_space<vmem>>, vector<16x128xf32>
    tpu.vector_store %arg6[%c0_11, %c0_12], %13 {strides = array<i32>} : memref<16x128xf32, #tpu.memory_space<vmem>>, vector<16x128xf32>,
    return
  }
  func.func @transform_0(%arg0: i32) -> (i32, i32) {
    %c0_i32 = arith.constant 0 : i32
    %c0_i32_0 = arith.constant 0 : i32
    return %arg0, %c0_i32 : i32, i32
  }
  func.func @transform_1(%arg0: i32) -> (i32, i32) {
    %c0_i32 = arith.constant 0 : i32
    %c0_i32_0 = arith.constant 0 : i32
    %c0_i32_1 = arith.constant 0 : i32
    return %c0_i32, %c0_i32_0 : i32, i32
  }
  func.func @transform_2(%arg0: i32) -> (i32, i32) {
    %c0_i32 = arith.constant 0 : i32
    %c0_i32_0 = arith.constant 0 : i32
    %c0_i32_1 = arith.constant 0 : i32
    return %c0_i32, %c0_i32_0 : i32, i32
  }
  func.func @transform_3(%arg0: i32) -> (i32, i32) {
    %c0_i32 = arith.constant 0 : i32
    %c0_i32_0 = arith.constant 0 : i32
    %c0_i32_1 = arith.constant 0 : i32
    return %c0_i32, %c0_i32_0 : i32, i32
  }
  func.func @transform_4(%arg0: i32) -> (i32, i32) {
    %c0_i32 = arith.constant 0 : i32
    %c0_i32_0 = arith.constant 0 : i32
    %c0_i32_1 = arith.constant 0 : i32
    return %c0_i32, %c0_i32_0 : i32, i32
  }
  func.func @transform_5(%arg0: i32) -> (i32, i32) {
    %c0_i32 = arith.constant 0 : i32
    %c0_i32_0 = arith.constant 0 : i32
    return %arg0, %c0_i32 : i32, i32
  }
}

</mosaic_0001>

<llo_original>
// kernel: _head_pallas.1
$region0: #{_head_pallas.1}
  #allocation0 [shape = 'u32[]', space=smem, size = 0x4, offset = 0x4, fixed_abs, tag = 'smem constant byte address 0x4 - core index']
  #allocation1 [shape = 'u32[144,128]{1,0:T(1,128)}', space=vmem, size = 0x12000, scoped, tag = 'internal scratch']
  %s0 = inlined_call_operand.vmem [shape: bf16[16,1024], index: 0, kind: input, shape index: {}]
  %s1 = inlined_call_operand.vmem [shape: bf16[1024,128], index: 1, kind: input, shape index: {}]
  %s2 = inlined_call_operand.vmem [shape: f32[1,128], index: 2, kind: input, shape index: {}]
  %s3 = inlined_call_operand.vmem [shape: bf16[128,128], index: 3, kind: input, shape index: {}]
  %s4 = inlined_call_operand.vmem [shape: f32[1,128], index: 4, kind: input, shape index: {}]
  %s5 = inlined_call_operand.vmem [shape: f32[16,128], index: 5, kind: output, shape index: {}]
  %s6 = sld [smem:[#allocation0]]
  $region30: #{_head_pallas.1} parent=0
    _
  %s8 = ssub.s32 1, %s6
  %s9 = scalar_select 0, %s8, %s6
  // Predicated region
  $region2: #{_head_pallas.1} parent=0 // pred_check
    _
  $region3: #{_head_pallas.1} parent=0 // pred_check_branch
    %11 = sbr.rel (0) target = $region5
  $region4: #{_head_pallas.1} parent=0 // pred_region
    _
  $region5: #{_head_pallas.1} parent=0 // pred_fallthru
    _
  // Predicated region
  $region6: #{_head_pallas.1} parent=0 // pred_check
    _
  $region7: #{_head_pallas.1} parent=0 // pred_check_branch
    %13 = sbr.rel (0) target = $region9
  $region8: #{_head_pallas.1} parent=0 // pred_region
    _
  $region9: #{_head_pallas.1} parent=0 // pred_fallthru
    _
  // Predicated region
  $region10: #{_head_pallas.1} parent=0 // pred_check
    _
  $region11: #{_head_pallas.1} parent=0 // pred_check_branch
    %15 = sbr.rel (0) target = $region13
  $region12: #{_head_pallas.1} parent=0 // pred_region
    _
  $region13: #{_head_pallas.1} parent=0 // pred_fallthru
    _
  // Predicated region
  $region14: #{_head_pallas.1} parent=0 // pred_check
    _
  $region15: #{_head_pallas.1} parent=0 // pred_check_branch
    %17 = sbr.rel (0) target = $region17
  $region16: #{_head_pallas.1} parent=0 // pred_region
    _
  $region17: #{_head_pallas.1} parent=0 // pred_fallthru
    _
  // Predicated region
  $region18: #{_head_pallas.1} parent=0 // pred_check
    _
  $region19: #{_head_pallas.1} parent=0 // pred_check_branch
    %19 = sbr.rel (0) target = $region21
  $region20: #{_head_pallas.1} parent=0 // pred_region
    _
  $region21: #{_head_pallas.1} parent=0 // pred_fallthru
    _
  %v21 = vld [vmem:[%s0] sm:$0xff]
  %v22 = vld [vmem:[%s0 + $0x8] sm:$0xff]
  %v23 = vld [vmem:[%s0 + $0x10] sm:$0xff]
  %v24 = vld [vmem:[%s0 + $0x18] sm:$0xff]
  %v25 = vld [vmem:[%s0 + $0x20] sm:$0xff]
  %v26 = vld [vmem:[%s0 + $0x28] sm:$0xff]
  %v27 = vld [vmem:[%s0 + $0x30] sm:$0xff]
  %v28 = vld [vmem:[%s0 + $0x38] sm:$0xff]
  %v29 = vld [vmem:[%s1] sm:$0xf]
  %v30 = vld [vmem:[%s1 + $0x4] sm:$0xf]
  %v31 = vld [vmem:[%s1 + $0x8] sm:$0xf]
  %v32 = vld [vmem:[%s1 + $0xc] sm:$0xf]
  %v33 = vld [vmem:[%s1 + $0x10] sm:$0xf]
  %v34 = vld [vmem:[%s1 + $0x14] sm:$0xf]
  %v35 = vld [vmem:[%s1 + $0x18] sm:$0xf]
  %v36 = vld [vmem:[%s1 + $0x1c] sm:$0xf]
  %v37 = vld [vmem:[%s1 + $0x20] sm:$0xf]
  %v38 = vld [vmem:[%s1 + $0x24] sm:$0xf]
  %v39 = vld [vmem:[%s1 + $0x28] sm:$0xf]
  %v40 = vld [vmem:[%s1 + $0x2c] sm:$0xf]
  %v41 = vld [vmem:[%s1 + $0x30] sm:$0xf]
  %v42 = vld [vmem:[%s1 + $0x34] sm:$0xf]
  %v43 = vld [vmem:[%s1 + $0x38] sm:$0xf]
  %v44 = vld [vmem:[%s1 + $0x3c] sm:$0xf]
  %v45 = vld [vmem:[%s1 + $0x40] sm:$0xf]
  %v46 = vld [vmem:[%s1 + $0x44] sm:$0xf]
  %v47 = vld [vmem:[%s1 + $0x48] sm:$0xf]
  %v48 = vld [vmem:[%s1 + $0x4c] sm:$0xf]
  %v49 = vld [vmem:[%s1 + $0x50] sm:$0xf]
  %v50 = vld [vmem:[%s1 + $0x54] sm:$0xf]
  %v51 = vld [vmem:[%s1 + $0x58] sm:$0xf]
  %v52 = vld [vmem:[%s1 + $0x5c] sm:$0xf]
  %v53 = vld [vmem:[%s1 + $0x60] sm:$0xf]
  %v54 = vld [vmem:[%s1 + $0x64] sm:$0xf]
  %v55 = vld [vmem:[%s1 + $0x68] sm:$0xf]
  %v56 = vld [vmem:[%s1 + $0x6c] sm:$0xf]
  %v57 = vld [vmem:[%s1 + $0x70] sm:$0xf]
  %v58 = vld [vmem:[%s1 + $0x74] sm:$0xf]
  %v59 = vld [vmem:[%s1 + $0x78] sm:$0xf]
  %v60 = vld [vmem:[%s1 + $0x7c] sm:$0xf]
  %v61 = vld [vmem:[%s1 + $0x80] sm:$0xf]
  %v62 = vld [vmem:[%s1 + $0x84] sm:$0xf]
  %v63 = vld [vmem:[%s1 + $0x88] sm:$0xf]
  %v64 = vld [vmem:[%s1 + $0x8c] sm:$0xf]
  %v65 = vld [vmem:[%s1 + $0x90] sm:$0xf]
  %v66 = vld [vmem:[%s1 + $0x94] sm:$0xf]
  %v67 = vld [vmem:[%s1 + $0x98] sm:$0xf]
  %v68 = vld [vmem:[%s1 + $0x9c] sm:$0xf]
  %v69 = vld [vmem:[%s1 + $0xa0] sm:$0xf]
  %v70 = vld [vmem:[%s1 + $0xa4] sm:$0xf]
  %v71 = vld [vmem:[%s1 + $0xa8] sm:$0xf]
  %v72 = vld [vmem:[%s1 + $0xac] sm:$0xf]
  %v73 = vld [vmem:[%s1 + $0xb0] sm:$0xf]
  %v74 = vld [vmem:[%s1 + $0xb4] sm:$0xf]
  %v75 = vld [vmem:[%s1 + $0xb8] sm:$0xf]
  %v76 = vld [vmem:[%s1 + $0xbc] sm:$0xf]
  %v77 = vld [vmem:[%s1 + $0xc0] sm:$0xf]
  %v78 = vld [vmem:[%s1 + $0xc4] sm:$0xf]
  %v79 = vld [vmem:[%s1 + $0xc8] sm:$0xf]
  %v80 = vld [vmem:[%s1 + $0xcc] sm:$0xf]
  %v81 = vld [vmem:[%s1 + $0xd0] sm:$0xf]
  %v82 = vld [vmem:[%s1 + $0xd4] sm:$0xf]
  %v83 = vld [vmem:[%s1 + $0xd8] sm:$0xf]
  %v84 = vld [vmem:[%s1 + $0xdc] sm:$0xf]
  %v85 = vld [vmem:[%s1 + $0xe0] sm:$0xf]
  %v86 = vld [vmem:[%s1 + $0xe4] sm:$0xf]
  %v87 = vld [vmem:[%s1 + $0xe8] sm:$0xf]
  %v88 = vld [vmem:[%s1 + $0xec] sm:$0xf]
  %v89 = vld [vmem:[%s1 + $0xf0] sm:$0xf]
  %v90 = vld [vmem:[%s1 + $0xf4] sm:$0xf]
  %v91 = vld [vmem:[%s1 + $0xf8] sm:$0xf]
  %v92 = vld [vmem:[%s1 + $0xfc] sm:$0xf]
  %v93 = vld [vmem:[%s1 + $0x100] sm:$0xf]
  %v94 = vld [vmem:[%s1 + $0x104] sm:$0xf]
  %v95 = vld [vmem:[%s1 + $0x108] sm:$0xf]
  %v96 = vld [vmem:[%s1 + $0x10c] sm:$0xf]
  %v97 = vld [vmem:[%s1 + $0x110] sm:$0xf]
  %v98 = vld [vmem:[%s1 + $0x114] sm:$0xf]
  %v99 = vld [vmem:[%s1 + $0x118] sm:$0xf]
  %v100 = vld [vmem:[%s1 + $0x11c] sm:$0xf]
  %v101 = vld [vmem:[%s1 + $0x120] sm:$0xf]
  %v102 = vld [vmem:[%s1 + $0x124] sm:$0xf]
  %v103 = vld [vmem:[%s1 + $0x128] sm:$0xf]
  %v104 = vld [vmem:[%s1 + $0x12c] sm:$0xf]
  %v105 = vld [vmem:[%s1 + $0x130] sm:$0xf]
  %v106 = vld [vmem:[%s1 + $0x134] sm:$0xf]
  %v107 = vld [vmem:[%s1 + $0x138] sm:$0xf]
  %v108 = vld [vmem:[%s1 + $0x13c] sm:$0xf]
  %v109 = vld [vmem:[%s1 + $0x140] sm:$0xf]
  %v110 = vld [vmem:[%s1 + $0x144] sm:$0xf]
  %v111 = vld [vmem:[%s1 + $0x148] sm:$0xf]
  %v112 = vld [vmem:[%s1 + $0x14c] sm:$0xf]
  %v113 = vld [vmem:[%s1 + $0x150] sm:$0xf]
  %v114 = vld [vmem:[%s1 + $0x154] sm:$0xf]
  %v115 = vld [vmem:[%s1 + $0x158] sm:$0xf]
  %v116 = vld [vmem:[%s1 + $0x15c] sm:$0xf]
  %v117 = vld [vmem:[%s1 + $0x160] sm:$0xf]
  %v118 = vld [vmem:[%s1 + $0x164] sm:$0xf]
  %v119 = vld [vmem:[%s1 + $0x168] sm:$0xf]
  %v120 = vld [vmem:[%s1 + $0x16c] sm:$0xf]
  %v121 = vld [vmem:[%s1 + $0x170] sm:$0xf]
  %v122 = vld [vmem:[%s1 + $0x174] sm:$0xf]
  %v123 = vld [vmem:[%s1 + $0x178] sm:$0xf]
  %v124 = vld [vmem:[%s1 + $0x17c] sm:$0xf]
  %v125 = vld [vmem:[%s1 + $0x180] sm:$0xf]
  %v126 = vld [vmem:[%s1 + $0x184] sm:$0xf]
  %v127 = vld [vmem:[%s1 + $0x188] sm:$0xf]
  %v128 = vld [vmem:[%s1 + $0x18c] sm:$0xf]
  %v129 = vld [vmem:[%s1 + $0x190] sm:$0xf]
  %v130 = vld [vmem:[%s1 + $0x194] sm:$0xf]
  %v131 = vld [vmem:[%s1 + $0x198] sm:$0xf]
  %v132 = vld [vmem:[%s1 + $0x19c] sm:$0xf]
  %v133 = vld [vmem:[%s1 + $0x1a0] sm:$0xf]
  %v134 = vld [vmem:[%s1 + $0x1a4] sm:$0xf]
  %v135 = vld [vmem:[%s1 + $0x1a8] sm:$0xf]
  %v136 = vld [vmem:[%s1 + $0x1ac] sm:$0xf]
  %v137 = vld [vmem:[%s1 + $0x1b0] sm:$0xf]
  %v138 = vld [vmem:[%s1 + $0x1b4] sm:$0xf]
  %v139 = vld [vmem:[%s1 + $0x1b8] sm:$0xf]
  %v140 = vld [vmem:[%s1 + $0x1bc] sm:$0xf]
  %v141 = vld [vmem:[%s1 + $0x1c0] sm:$0xf]
  %v142 = vld [vmem:[%s1 + $0x1c4] sm:$0xf]
  %v143 = vld [vmem:[%s1 + $0x1c8] sm:$0xf]
  %v144 = vld [vmem:[%s1 + $0x1cc] sm:$0xf]
  %v145 = vld [vmem:[%s1 + $0x1d0] sm:$0xf]
  %v146 = vld [vmem:[%s1 + $0x1d4] sm:$0xf]
  %v147 = vld [vmem:[%s1 + $0x1d8] sm:$0xf]
  %v148 = vld [vmem:[%s1 + $0x1dc] sm:$0xf]
  %v149 = vld [vmem:[%s1 + $0x1e0] sm:$0xf]
  %v150 = vld [vmem:[%s1 + $0x1e4] sm:$0xf]
  %v151 = vld [vmem:[%s1 + $0x1e8] sm:$0xf]
  %v152 = vld [vmem:[%s1 + $0x1ec] sm:$0xf]
  %v153 = vld [vmem:[%s1 + $0x1f0] sm:$0xf]
  %v154 = vld [vmem:[%s1 + $0x1f4] sm:$0xf]
  %v155 = vld [vmem:[%s1 + $0x1f8] sm:$0xf]
  %v156 = vld [vmem:[%s1 + $0x1fc] sm:$0xf]
  %v157 = vld [vmem:[%s2] sm:$0x1]
  %v159 = vlaneseq
  %v160 = vshrl.u32 %v159, 7
  %v161 = vsub.s32 0, %v160
  %v162 = vrot.slane %v157, %v161
  %v172 = vunpack.c.l.b16 %v21
  %v173 = vunpack.c.h.b16 %v21
  %v174 = vunpack.c.l.b16 %v22
  %v175 = vunpack.c.h.b16 %v22
  %v176 = vunpack.c.l.b16 %v23
  %v177 = vunpack.c.h.b16 %v23
  %v178 = vunpack.c.l.b16 %v24
  %v179 = vunpack.c.h.b16 %v24
  %v180 = vunpack.c.l.b16 %v25
  %v181 = vunpack.c.h.b16 %v25
  %v182 = vunpack.c.l.b16 %v26
  %v183 = vunpack.c.h.b16 %v26
  %v184 = vunpack.c.l.b16 %v27
  %v185 = vunpack.c.h.b16 %v27
  %v186 = vunpack.c.l.b16 %v28
  %v187 = vunpack.c.h.b16 %v28
  %v188 = vpack.c.b16 %v180, %v172
  %v189 = vpack.c.b16 %v181, %v173
  %v190 = vpack.c.b16 %v182, %v174
  %v191 = vpack.c.b16 %v183, %v175
  %v192 = vpack.c.b16 %v184, %v176
  %v193 = vpack.c.b16 %v185, %v177
  %v194 = vpack.c.b16 %v186, %v178
  %v195 = vpack.c.b16 %v187, %v179
  %v332 = vunpack.c.l.b16 %v29
  %v333 = vunpack.c.l.b16 %v30
  %v334 = vunpack.c.l.b16 %v31
  %v335 = vunpack.c.l.b16 %v32
  %v336 = vunpack.c.l.b16 %v33
  %v337 = vunpack.c.l.b16 %v34
  %v338 = vunpack.c.l.b16 %v35
  %v339 = vunpack.c.l.b16 %v36
  %v340 = vunpack.c.l.b16 %v37
  %v341 = vunpack.c.l.b16 %v38
  %v342 = vunpack.c.l.b16 %v39
  %v343 = vunpack.c.l.b16 %v40
  %v344 = vunpack.c.l.b16 %v41
  %v345 = vunpack.c.l.b16 %v42
  %v346 = vunpack.c.l.b16 %v43
  %v347 = vunpack.c.l.b16 %v44
  %v348 = vunpack.c.l.b16 %v45
  %v349 = vunpack.c.l.b16 %v46
  %v350 = vunpack.c.l.b16 %v47
  %v351 = vunpack.c.l.b16 %v48
  %v352 = vunpack.c.l.b16 %v49
  %v353 = vunpack.c.l.b16 %v50
  %v354 = vunpack.c.l.b16 %v51
  %v355 = vunpack.c.l.b16 %v52
  %v356 = vunpack.c.l.b16 %v53
  %v357 = vunpack.c.l.b16 %v54
  %v358 = vunpack.c.l.b16 %v55
  %v359 = vunpack.c.l.b16 %v56
  %v360 = vunpack.c.l.b16 %v57
  %v361 = vunpack.c.l.b16 %v58
  %v362 = vunpack.c.l.b16 %v59
  %v363 = vunpack.c.l.b16 %v60
  %v364 = vunpack.c.l.b16 %v61
  %v365 = vunpack.c.l.b16 %v62
  %v366 = vunpack.c.l.b16 %v63
  %v367 = vunpack.c.l.b16 %v64
  %v368 = vunpack.c.l.b16 %v65
  %v369 = vunpack.c.l.b16 %v66
  %v370 = vunpack.c.l.b16 %v67
  %v371 = vunpack.c.l.b16 %v68
  %v372 = vunpack.c.l.b16 %v69
  %v373 = vunpack.c.l.b16 %v70
  %v374 = vunpack.c.l.b16 %v71
  %v375 = vunpack.c.l.b16 %v72
  %v376 = vunpack.c.l.b16 %v73
  %v377 = vunpack.c.l.b16 %v74
  %v378 = vunpack.c.l.b16 %v75
  %v379 = vunpack.c.l.b16 %v76
  %v380 = vunpack.c.l.b16 %v77
  %v381 = vunpack.c.l.b16 %v78
  %v382 = vunpack.c.l.b16 %v79
  %v383 = vunpack.c.l.b16 %v80
  %v384 = vunpack.c.l.b16 %v81
  %v385 = vunpack.c.l.b16 %v82
  %v386 = vunpack.c.l.b16 %v83
  %v387 = vunpack.c.l.b16 %v84
  %v388 = vunpack.c.l.b16 %v85
  %v389 = vunpack.c.l.b16 %v86
  %v390 = vunpack.c.l.b16 %v87
  %v391 = vunpack.c.l.b16 %v88
  %v392 = vunpack.c.l.b16 %v89
  %v393 = vunpack.c.l.b16 %v90
  %v394 = vunpack.c.l.b16 %v91
  %v395 = vunpack.c.l.b16 %v92
  %v396 = vunpack.c.l.b16 %v93
  %v397 = vunpack.c.l.b16 %v94
  %v398 = vunpack.c.l.b16 %v95
  %v399 = vunpack.c.l.b16 %v96
  %v400 = vunpack.c.l.b16 %v97
  %v401 = vunpack.c.l.b16 %v98
  %v402 = vunpack.c.l.b16 %v99
  %v403 = vunpack.c.l.b16 %v100
  %v404 = vunpack.c.l.b16 %v101
  %v405 = vunpack.c.l.b16 %v102
  %v406 = vunpack.c.l.b16 %v103
  %v407 = vunpack.c.l.b16 %v104
  %v408 = vunpack.c.l.b16 %v105
  %v409 = vunpack.c.l.b16 %v106
  %v410 = vunpack.c.l.b16 %v107
  %v411 = vunpack.c.l.b16 %v108
  %v412 = vunpack.c.l.b16 %v109
  %v413 = vunpack.c.l.b16 %v110
  %v414 = vunpack.c.l.b16 %v111
  %v415 = vunpack.c.l.b16 %v112
  %v416 = vunpack.c.l.b16 %v113
  %v417 = vunpack.c.l.b16 %v114
  %v418 = vunpack.c.l.b16 %v115
  %v419 = vunpack.c.l.b16 %v116
  %v420 = vunpack.c.l.b16 %v117
  %v421 = vunpack.c.l.b16 %v118
  %v422 = vunpack.c.l.b16 %v119
  %v423 = vunpack.c.l.b16 %v120
  %v424 = vunpack.c.l.b16 %v121
  %v425 = vunpack.c.l.b16 %v122
  %v426 = vunpack.c.l.b16 %v123
  %v427 = vunpack.c.l.b16 %v124
  %v428 = vunpack.c.l.b16 %v125
  %v429 = vunpack.c.l.b16 %v126
  %v430 = vunpack.c.l.b16 %v127
  %v431 = vunpack.c.l.b16 %v128
  %v432 = vunpack.c.l.b16 %v129
  %v433 = vunpack.c.l.b16 %v130
  %v434 = vunpack.c.l.b16 %v131
  %v435 = vunpack.c.l.b16 %v132
  %v436 = vunpack.c.l.b16 %v133
  %v437 = vunpack.c.l.b16 %v134
  %v438 = vunpack.c.l.b16 %v135
  %v439 = vunpack.c.l.b16 %v136
  %v440 = vunpack.c.l.b16 %v137
  %v441 = vunpack.c.l.b16 %v138
  %v442 = vunpack.c.l.b16 %v139
  %v443 = vunpack.c.l.b16 %v140
  %v444 = vunpack.c.l.b16 %v141
  %v445 = vunpack.c.l.b16 %v142
  %v446 = vunpack.c.l.b16 %v143
  %v447 = vunpack.c.l.b16 %v144
  %v448 = vunpack.c.l.b16 %v145
  %v449 = vunpack.c.l.b16 %v146
  %v450 = vunpack.c.l.b16 %v147
  %v451 = vunpack.c.l.b16 %v148
  %v452 = vunpack.c.l.b16 %v149
  %v453 = vunpack.c.l.b16 %v150
  %v454 = vunpack.c.l.b16 %v151
  %v455 = vunpack.c.l.b16 %v152
  %v456 = vunpack.c.l.b16 %v153
  %v457 = vunpack.c.l.b16 %v154
  %v458 = vunpack.c.l.b16 %v155
  %v459 = vunpack.c.l.b16 %v156
  %v460 = vpack.c.b16 %v333, %v332
  %v461 = vpack.c.b16 %v335, %v334
  %v462 = vpack.c.b16 %v337, %v336
  %v463 = vpack.c.b16 %v339, %v338
  %v464 = vpack.c.b16 %v341, %v340
  %v465 = vpack.c.b16 %v343, %v342
  %v466 = vpack.c.b16 %v345, %v344
  %v467 = vpack.c.b16 %v347, %v346
  %v468 = vpack.c.b16 %v349, %v348
  %v469 = vpack.c.b16 %v351, %v350
  %v470 = vpack.c.b16 %v353, %v352
  %v471 = vpack.c.b16 %v355, %v354
  %v472 = vpack.c.b16 %v357, %v356
  %v473 = vpack.c.b16 %v359, %v358
  %v474 = vpack.c.b16 %v361, %v360
  %v475 = vpack.c.b16 %v363, %v362
  %v476 = vpack.c.b16 %v365, %v364
  %v477 = vpack.c.b16 %v367, %v366
  %v478 = vpack.c.b16 %v369, %v368
  %v479 = vpack.c.b16 %v371, %v370
  %v480 = vpack.c.b16 %v373, %v372
  %v481 = vpack.c.b16 %v375, %v374
  %v482 = vpack.c.b16 %v377, %v376
  %v483 = vpack.c.b16 %v379, %v378
  %v484 = vpack.c.b16 %v381, %v380
  %v485 = vpack.c.b16 %v383, %v382
  %v486 = vpack.c.b16 %v385, %v384
  %v487 = vpack.c.b16 %v387, %v386
  %v488 = vpack.c.b16 %v389, %v388
  %v489 = vpack.c.b16 %v391, %v390
  %v490 = vpack.c.b16 %v393, %v392
  %v491 = vpack.c.b16 %v395, %v394
  %v492 = vpack.c.b16 %v397, %v396
  %v493 = vpack.c.b16 %v399, %v398
  %v494 = vpack.c.b16 %v401, %v400
  %v495 = vpack.c.b16 %v403, %v402
  %v496 = vpack.c.b16 %v405, %v404
  %v497 = vpack.c.b16 %v407, %v406
  %v498 = vpack.c.b16 %v409, %v408
  %v499 = vpack.c.b16 %v411, %v410
  %v500 = vpack.c.b16 %v413, %v412
  %v501 = vpack.c.b16 %v415, %v414
  %v502 = vpack.c.b16 %v417, %v416
  %v503 = vpack.c.b16 %v419, %v418
  %v504 = vpack.c.b16 %v421, %v420
  %v505 = vpack.c.b16 %v423, %v422
  %v506 = vpack.c.b16 %v425, %v424
  %v507 = vpack.c.b16 %v427, %v426
  %v508 = vpack.c.b16 %v429, %v428
  %v509 = vpack.c.b16 %v431, %v430
  %v510 = vpack.c.b16 %v433, %v432
  %v511 = vpack.c.b16 %v435, %v434
  %v512 = vpack.c.b16 %v437, %v436
  %v513 = vpack.c.b16 %v439, %v438
  %v514 = vpack.c.b16 %v441, %v440
  %v515 = vpack.c.b16 %v443, %v442
  %v516 = vpack.c.b16 %v445, %v444
  %v517 = vpack.c.b16 %v447, %v446
  %v518 = vpack.c.b16 %v449, %v448
  %v519 = vpack.c.b16 %v451, %v450
  %v520 = vpack.c.b16 %v453, %v452
  %v521 = vpack.c.b16 %v455, %v454
  %v522 = vpack.c.b16 %v457, %v456
  %v523 = vpack.c.b16 %v459, %v458
  %588 = vmatprep.subr.bf16.mxu0 0
  %589 = vmatpush1.bf16.msra.mxu0 %v460
  %590 = vmatprep.subr.bf16.mxu0 0
  %591 = vmatpush1.bf16.msra.mxu0 %v461
  %592 = vmatprep.subr.bf16.mxu0 0
  %593 = vmatpush1.bf16.msra.mxu0 %v462
  %594 = vmatprep.subr.bf16.mxu0 0
  %595 = vmatpush1.bf16.msra.mxu0 %v463
  %596 = vmatprep.subr.bf16.mxu0 0
  %597 = vmatpush1.bf16.msra.mxu0 %v464
  %598 = vmatprep.subr.bf16.mxu0 0
  %599 = vmatpush1.bf16.msra.mxu0 %v465
  %600 = vmatprep.subr.bf16.mxu0 0
  %601 = vmatpush1.bf16.msra.mxu0 %v466
  %602 = vmatprep.subr.bf16.mxu0 0
  %603 = vmatpush1.bf16.msra.mxu0 %v467
  %604 = vmatprep.subr.bf16.mxu0 0
  %605 = vmatpush1.bf16.msra.mxu0 %v468
  %606 = vmatprep.subr.bf16.mxu0 0
  %607 = vmatpush1.bf16.msra.mxu0 %v469
  %608 = vmatprep.subr.bf16.mxu0 0
  %609 = vmatpush1.bf16.msra.mxu0 %v470
  %610 = vmatprep.subr.bf16.mxu0 0
  %611 = vmatpush1.bf16.msra.mxu0 %v471
  %612 = vmatprep.subr.bf16.mxu0 0
  %613 = vmatpush1.bf16.msra.mxu0 %v472
  %614 = vmatprep.subr.bf16.mxu0 0
  %615 = vmatpush1.bf16.msra.mxu0 %v473
  %616 = vmatprep.subr.bf16.mxu0 0
  %617 = vmatpush1.bf16.msra.mxu0 %v474
  %618 = vmatprep.subr.bf16.mxu0 0
  %619 = vmatpush1.bf16.msra.mxu0 %v475
  %620 = vmatprep.mubr.bf16.mxu0 %v189
  %621 = vmatmul.mubr.bf16.gmra.mrb[0].mxu0 %v188
  %v622 = vpop.f32.mrb[0].mxu0
  %v623 = vadd.f32 %v162, %v622
  %v624 = vpop.f32.mrb[0].mxu0
  %v625 = vpop.f32.mrb[0].mxu0
  %v626 = vadd.f32 %v162, %v625
  %v627 = vpop.f32.mrb[0].mxu0
  %628 = vdwg.mxu0
  %629 = vmatprep.subr.bf16.mxu0 0
  %630 = vmatpush1.bf16.msra.mxu0 %v476
  %631 = vmatprep.subr.bf16.mxu0 0
  %632 = vmatpush1.bf16.msra.mxu0 %v477
  %633 = vmatprep.subr.bf16.mxu0 0
  %634 = vmatpush1.bf16.msra.mxu0 %v478
  %635 = vmatprep.subr.bf16.mxu0 0
  %636 = vmatpush1.bf16.msra.mxu0 %v479
  %637 = vmatprep.subr.bf16.mxu0 0
  %638 = vmatpush1.bf16.msra.mxu0 %v480
  %639 = vmatprep.subr.bf16.mxu0 0
  %640 = vmatpush1.bf16.msra.mxu0 %v481
  %641 = vmatprep.subr.bf16.mxu0 0
  %642 = vmatpush1.bf16.msra.mxu0 %v482
  %643 = vmatprep.subr.bf16.mxu0 0
  %644 = vmatpush1.bf16.msra.mxu0 %v483
  %645 = vmatprep.subr.bf16.mxu0 0
  %646 = vmatpush1.bf16.msra.mxu0 %v484
  %647 = vmatprep.subr.bf16.mxu0 0
  %648 = vmatpush1.bf16.msra.mxu0 %v485
  %649 = vmatprep.subr.bf16.mxu0 0
  %650 = vmatpush1.bf16.msra.mxu0 %v486
  %651 = vmatprep.subr.bf16.mxu0 0
  %652 = vmatpush1.bf16.msra.mxu0 %v487
  %653 = vmatprep.subr.bf16.mxu0 0
  %654 = vmatpush1.bf16.msra.mxu0 %v488
  %655 = vmatprep.subr.bf16.mxu0 0
  %656 = vmatpush1.bf16.msra.mxu0 %v489
  %657 = vmatprep.subr.bf16.mxu0 0
  %658 = vmatpush1.bf16.msra.mxu0 %v490
  %659 = vmatprep.subr.bf16.mxu0 0
  %660 = vmatpush1.bf16.msra.mxu0 %v491
  %661 = vmatprep.mubr.bf16.mxu0 %v191
  %662 = vmatmul.mubr.bf16.gmra.mrb[0].mxu0 %v190
  %v663 = vpop.f32.mrb[0].mxu0
  %v664 = vadd.f32 %v623, %v663
  %v665 = vpop.f32.mrb[0].mxu0
  %v666 = vpop.f32.mrb[0].mxu0
  %v667 = vadd.f32 %v626, %v666
  %v668 = vpop.f32.mrb[0].mxu0
  %669 = vdwg.mxu0
  %670 = vmatprep.subr.bf16.mxu0 0
  %671 = vmatpush1.bf16.msra.mxu0 %v492
  %672 = vmatprep.subr.bf16.mxu0 0
  %673 = vmatpush1.bf16.msra.mxu0 %v493
  %674 = vmatprep.subr.bf16.mxu0 0
  %675 = vmatpush1.bf16.msra.mxu0 %v494
  %676 = vmatprep.subr.bf16.mxu0 0
  %677 = vmatpush1.bf16.msra.mxu0 %v495
  %678 = vmatprep.subr.bf16.mxu0 0
  %679 = vmatpush1.bf16.msra.mxu0 %v496
  %680 = vmatprep.subr.bf16.mxu0 0
  %681 = vmatpush1.bf16.msra.mxu0 %v497
  %682 = vmatprep.subr.bf16.mxu0 0
  %683 = vmatpush1.bf16.msra.mxu0 %v498
  %684 = vmatprep.subr.bf16.mxu0 0
  %685 = vmatpush1.bf16.msra.mxu0 %v499
  %686 = vmatprep.subr.bf16.mxu0 0
  %687 = vmatpush1.bf16.msra.mxu0 %v500
  %688 = vmatprep.subr.bf16.mxu0 0
  %689 = vmatpush1.bf16.msra.mxu0 %v501
  %690 = vmatprep.subr.bf16.mxu0 0
  %691 = vmatpush1.bf16.msra.mxu0 %v502
  %692 = vmatprep.subr.bf16.mxu0 0
  %693 = vmatpush1.bf16.msra.mxu0 %v503
  %694 = vmatprep.subr.bf16.mxu0 0
  %695 = vmatpush1.bf16.msra.mxu0 %v504
  %696 = vmatprep.subr.bf16.mxu0 0
  %697 = vmatpush1.bf16.msra.mxu0 %v505
  %698 = vmatprep.subr.bf16.mxu0 0
  %699 = vmatpush1.bf16.msra.mxu0 %v506
  %700 = vmatprep.subr.bf16.mxu0 0
  %701 = vmatpush1.bf16.msra.mxu0 %v507
  %702 = vmatprep.mubr.bf16.mxu0 %v193
  %703 = vmatmul.mubr.bf16.gmra.mrb[0].mxu0 %v192
  %v704 = vpop.f32.mrb[0].mxu0
  %v705 = vadd.f32 %v664, %v704
  %v706 = vpop.f32.mrb[0].mxu0
  %v707 = vpop.f32.mrb[0].mxu0
  %v708 = vadd.f32 %v667, %v707
  %v709 = vpop.f32.mrb[0].mxu0
  %710 = vdwg.mxu0
  %711 = vmatprep.subr.bf16.mxu0 0
  %712 = vmatpush1.bf16.msra.mxu0 %v508
  %713 = vmatprep.subr.bf16.mxu0 0
  %714 = vmatpush1.bf16.msra.mxu0 %v509
  %715 = vmatprep.subr.bf16.mxu0 0
  %716 = vmatpush1.bf16.msra.mxu0 %v510
  %717 = vmatprep.subr.bf16.mxu0 0
  %718 = vmatpush1.bf16.msra.mxu0 %v511
  %719 = vmatprep.subr.bf16.mxu0 0
  %720 = vmatpush1.bf16.msra.mxu0 %v512
  %721 = vmatprep.subr.bf16.mxu0 0
  %722 = vmatpush1.bf16.msra.mxu0 %v513
  %723 = vmatprep.subr.bf16.mxu0 0
  %724 = vmatpush1.bf16.msra.mxu0 %v514
  %725 = vmatprep.subr.bf16.mxu0 0
  %726 = vmatpush1.bf16.msra.mxu0 %v515
  %727 = vmatprep.subr.bf16.mxu0 0
  %728 = vmatpush1.bf16.msra.mxu0 %v516
  %729 = vmatprep.subr.bf16.mxu0 0
  %730 = vmatpush1.bf16.msra.mxu0 %v517
  %731 = vmatprep.subr.bf16.mxu0 0
  %732 = vmatpush1.bf16.msra.mxu0 %v518
  %733 = vmatprep.subr.bf16.mxu0 0
  %734 = vmatpush1.bf16.msra.mxu0 %v519
  %735 = vmatprep.subr.bf16.mxu0 0
  %736 = vmatpush1.bf16.msra.mxu0 %v520
  %737 = vmatprep.subr.bf16.mxu0 0
  %738 = vmatpush1.bf16.msra.mxu0 %v521
  %739 = vmatprep.subr.bf16.mxu0 0
  %740 = vmatpush1.bf16.msra.mxu0 %v522
  %741 = vmatprep.subr.bf16.mxu0 0
  %742 = vmatpush1.bf16.msra.mxu0 %v523
  %743 = vmatprep.mubr.bf16.mxu0 %v195
  %744 = vmatmul.mubr.bf16.gmra.mrb[0].mxu0 %v194
  %v745 = vpop.f32.mrb[0].mxu0
  %v746 = vadd.f32 %v705, %v745
  %v747 = vpop.f32.mrb[0].mxu0
  %v748 = vpop.f32.mrb[0].mxu0
  %v749 = vadd.f32 %v708, %v748
  %v750 = vpop.f32.mrb[0].mxu0
  %751 = vdwg.mxu0
  %v752 = vmax.f32 %v746, 0.0
  %v753 = vmax.f32 %v749, 0.0
  %v754 = vpack.c.bf16 %v753, %v752
  %v755 = vld [vmem:[%s3] sm:$0xf]
  %v756 = vld [vmem:[%s3 + $0x4] sm:$0xf]
  %v757 = vld [vmem:[%s3 + $0x8] sm:$0xf]
  %v758 = vld [vmem:[%s3 + $0xc] sm:$0xf]
  %v759 = vld [vmem:[%s3 + $0x10] sm:$0xf]
  %v760 = vld [vmem:[%s3 + $0x14] sm:$0xf]
  %v761 = vld [vmem:[%s3 + $0x18] sm:$0xf]
  %v762 = vld [vmem:[%s3 + $0x1c] sm:$0xf]
  %v763 = vld [vmem:[%s3 + $0x20] sm:$0xf]
  %v764 = vld [vmem:[%s3 + $0x24] sm:$0xf]
  %v765 = vld [vmem:[%s3 + $0x28] sm:$0xf]
  %v766 = vld [vmem:[%s3 + $0x2c] sm:$0xf]
  %v767 = vld [vmem:[%s3 + $0x30] sm:$0xf]
  %v768 = vld [vmem:[%s3 + $0x34] sm:$0xf]
  %v769 = vld [vmem:[%s3 + $0x38] sm:$0xf]
  %v770 = vld [vmem:[%s3 + $0x3c] sm:$0xf]
  %v771 = vld [vmem:[%s4] sm:$0x1]
  %v773 = vlaneseq
  %v774 = vshrl.u32 %v773, 7
  %v775 = vsub.s32 0, %v774
  %v776 = vrot.slane %v771, %v775
  %v794 = vunpack.c.l.b16 %v755
  %v795 = vunpack.c.l.b16 %v756
  %v796 = vunpack.c.l.b16 %v757
  %v797 = vunpack.c.l.b16 %v758
  %v798 = vunpack.c.l.b16 %v759
  %v799 = vunpack.c.l.b16 %v760
  %v800 = vunpack.c.l.b16 %v761
  %v801 = vunpack.c.l.b16 %v762
  %v802 = vunpack.c.l.b16 %v763
  %v803 = vunpack.c.l.b16 %v764
  %v804 = vunpack.c.l.b16 %v765
  %v805 = vunpack.c.l.b16 %v766
  %v806 = vunpack.c.l.b16 %v767
  %v807 = vunpack.c.l.b16 %v768
  %v808 = vunpack.c.l.b16 %v769
  %v809 = vunpack.c.l.b16 %v770
  %v810 = vpack.c.b16 %v795, %v794
  %v811 = vpack.c.b16 %v797, %v796
  %v812 = vpack.c.b16 %v799, %v798
  %v813 = vpack.c.b16 %v801, %v800
  %v814 = vpack.c.b16 %v803, %v802
  %v815 = vpack.c.b16 %v805, %v804
  %v816 = vpack.c.b16 %v807, %v806
  %v817 = vpack.c.b16 %v809, %v808
  %826 = vmatprep.subr.bf16.mxu0 0
  %827 = vmatpush1.bf16.msra.mxu0 %v810
  %828 = vmatprep.subr.bf16.mxu0 0
  %829 = vmatpush1.bf16.msra.mxu0 %v811
  %830 = vmatprep.subr.bf16.mxu0 0
  %831 = vmatpush1.bf16.msra.mxu0 %v812
  %832 = vmatprep.subr.bf16.mxu0 0
  %833 = vmatpush1.bf16.msra.mxu0 %v813
  %834 = vmatprep.subr.bf16.mxu0 0
  %835 = vmatpush1.bf16.msra.mxu0 %v814
  %836 = vmatprep.subr.bf16.mxu0 0
  %837 = vmatpush1.bf16.msra.mxu0 %v815
  %838 = vmatprep.subr.bf16.mxu0 0
  %839 = vmatpush1.bf16.msra.mxu0 %v816
  %840 = vmatprep.subr.bf16.mxu0 0
  %841 = vmatpush1.bf16.msra.mxu0 %v817
  %842 = vmatprep.subr.bf16.mxu0 0
  %843 = vmatpush1.bf16.msra.mxu0 0
  %844 = vmatprep.subr.bf16.mxu0 0
  %845 = vmatpush1.bf16.msra.mxu0 0
  %846 = vmatprep.subr.bf16.mxu0 0
  %847 = vmatpush1.bf16.msra.mxu0 0
  %848 = vmatprep.subr.bf16.mxu0 0
  %849 = vmatpush1.bf16.msra.mxu0 0
  %850 = vmatprep.subr.bf16.mxu0 0
  %851 = vmatpush1.bf16.msra.mxu0 0
  %852 = vmatprep.subr.bf16.mxu0 0
  %853 = vmatpush1.bf16.msra.mxu0 0
  %854 = vmatprep.subr.bf16.mxu0 0
  %855 = vmatpush1.bf16.msra.mxu0 0
  %856 = vmatprep.subr.bf16.mxu0 0
  %857 = vmatpush1.bf16.msra.mxu0 0
  %858 = vmatprep.mubr.bf16.mxu0 0
  %859 = vmatmul.mubr.bf16.gmra.mrb[0].mxu0 %v754
  %v860 = vpop.f32.mrb[0].mxu0
  %v861 = vadd.f32 %v776, %v860
  %v862 = vpop.f32.mrb[0].mxu0
  %v863 = vpop.f32.mrb[0].mxu0
  %v864 = vadd.f32 %v776, %v863
  %v865 = vpop.f32.mrb[0].mxu0
  %866 = vdwg.mxu0
  %867 = vst [vmem:[%s5] sm:$0xff] %v861
  %868 = vst [vmem:[%s5 + $0x8] sm:$0xff] %v864
  // Predicated region
  $region22: #{_head_pallas.1} parent=0 // pred_check
    _
  $region23: #{_head_pallas.1} parent=0 // pred_check_branch
    %870 = sbr.rel (0) target = $region25
  $region24: #{_head_pallas.1} parent=0 // pred_region
    _
  $region25: #{_head_pallas.1} parent=0 // pred_fallthru
    _
  // Predicated region
  $region26: #{_head_pallas.1} parent=0 // pred_check
    _
  $region27: #{_head_pallas.1} parent=0 // pred_check_branch
    %872 = sbr.rel (0) target = $region29
  $region28: #{_head_pallas.1} parent=0 // pred_region
    _
  $region29: #{_head_pallas.1} parent=0 // pred_fallthru
    _

</llo_original>
